<compile_context>
chip_gen: v6e
topology: v6e:2x2x1
jax: 0.10.0
libtpu: 0.0.40
codegen_flags: <defaults>
</compile_context>

<pallas_src>
import functools
import math

import jax
import jax.numpy as jnp
from jax.experimental import pallas as pl
from jax.experimental.pallas import tpu as pltpu


# ----------------------------------------------------------------------------
# Fused Pallas kernel: ChebConv x2 + 1x1 Conv1d + log_softmax (whole batch)
# ----------------------------------------------------------------------------
def _chebnet_fused_kernel(xt_ref, h1_ref, g_ref, cb_ref, o_ref, *, d_dim):
    """Fully folded forward pass.

    xt : [B, C*2N]        flattened channel-major features (lanes 0..N-1 real,
                          N..2N-1 imag within each channel slab); 128 lanes here.
    h1 : [C*2N, F*2N]     layer-1 operator (Chebyshev orders + complex branches + W1 folded)
    g  : [D, F*2N, N]     layer-2 + Conv1d-head operator, one slab per output label
    cb : [D, B, N]        Conv1d bias, pre-broadcast (tiny)
    o  : [D, B, N]        log-probabilities (transposed to [B, D, N] by the wrapper)
    """
    # Layer 1: one MXU dot covers all K+1 orders, both complex branches, whole batch.
    yt = jnp.dot(xt_ref[...], h1_ref[...],
                 preferred_element_type=jnp.float32)                   # [B, F*2N]

    # Layer 2 + 1x1 Conv1d head: one small dot per output label (independent dots).
    logits = [jnp.dot(yt, g_ref[d], preferred_element_type=jnp.float32) + cb_ref[d]
              for d in range(d_dim)]                                   # D x [B, N]

    # Stable log_softmax over the label axis — purely elementwise VPU/EUP work on the
    # D per-label tiles: no cross-lane reduction, no lane slicing, no in-kernel concat.
    m = logits[0]
    for lg in logits[1:]:
        m = jnp.maximum(m, lg)
    s = jnp.exp(logits[0] - m)
    for lg in logits[1:]:
        s = s + jnp.exp(lg - m)
    lse = m + jnp.log(s)
    for d in range(d_dim):
        o_ref[d] = logits[d] - lse                                     # [B, N]


# ----------------------------------------------------------------------------
# Wrapper: parameter folding (trace-time, input-independent) + single pallas_call
# ----------------------------------------------------------------------------
@jax.jit
def chebnet_forward(real, imag, l_real, l_imag, w1, w2, conv_w, conv_b):
    """real/imag: [B,N,C]; l_*: [K+1,N,N]; w1:[K+1,1,C,F]; w2:[K+1,1,F,F];
    conv_w: [D, 2F, 1]; conv_b: [D].  Returns [B, D, N] (PyTorch layout)."""
    b, n, c_in = real.shape
    f_dim = w1.shape[-1]
    d_dim = conv_w.shape[0]
    two_n = 2 * n

    # ---- parameter-only folding (weights x Laplacian): tiny, done once per trace ----
    # stacked complex Chebyshev Laplacian blk_k = [[L_r,-L_i],[L_i,L_r]]
    top = jnp.concatenate([l_real, -l_imag], axis=2)                  # [K+1, N, 2N]
    bot = jnp.concatenate([l_imag, l_real], axis=2)                   # [K+1, N, 2N]
    blk = jnp.concatenate([top, bot], axis=1)                         # [K+1, 2N, 2N]

    # layer-1 operator: h1[c*2N+m', f*2N+m] = sum_k W1_k[c,f] * blk_k[m, m']
    h1 = jnp.einsum('kcf,kmp->cpfm', w1[:, 0], blk).reshape(c_in * two_n, f_dim * two_n)

    # layer-2 + 1x1 Conv1d head operator, split per output label:
    #   g3[d, f*2N+m', n] = sum_{k,f2} W2_k[f,f2]*(Hr[d,f2]*blk_k[n,m'] + Hi[d,f2]*blk_k[N+n,m'])
    hr = conv_w[:, :f_dim, 0]                                         # [D, F]  (real half)
    hi = conv_w[:, f_dim:, 0]                                         # [D, F]  (imag half)
    g4 = (jnp.einsum('kfg,dg,knp->fpdn', w2[:, 0], hr, blk[:, :n, :]) +
          jnp.einsum('kfg,dg,knp->fpdn', w2[:, 0], hi, blk[:, n:, :]))  # [F, 2N, D, N]
    g3 = jnp.transpose(g4, (2, 0, 1, 3)).reshape(d_dim, f_dim * two_n, n)

    # flattened, lane-dense channel-major input: xt[b, c*2N + m]
    x2 = jnp.concatenate([real, imag], axis=1)                        # [B, 2N, C]
    xt = jnp.transpose(x2, (0, 2, 1)).reshape(b, c_in * two_n)        # [B, C*2N]

    # Conv1d bias, pre-broadcast to exact tile shape (64 floats — trivial).
    cb = jnp.broadcast_to(conv_b[:, None, None], (d_dim, b, n)).astype(jnp.float32)

    kernel = functools.partial(_chebnet_fused_kernel, d_dim=d_dim)

    out = pl.pallas_call(
        kernel,
        out_shape=jax.ShapeDtypeStruct((d_dim, b, n), jnp.float32),
        grid=(1,),
        in_specs=[
            pl.BlockSpec((b, c_in * two_n), lambda i: (0, 0)),
            pl.BlockSpec((c_in * two_n, f_dim * two_n), lambda i: (0, 0)),
            pl.BlockSpec((d_dim, f_dim * two_n, n), lambda i: (0, 0, 0)),
            pl.BlockSpec((d_dim, b, n), lambda i: (0, 0, 0)),
        ],
        out_specs=pl.BlockSpec((d_dim, b, n), lambda i: (0, 0, 0)),
        compiler_params=pltpu.CompilerParams(
            dimension_semantics=("arbitrary",)),
    )(xt, h1, g3, cb)

    # layout plumbing only: [D, B, N] -> PyTorch [B, D, N]
    return jnp.transpose(out, (1, 0, 2))


# ----------------------------------------------------------------------------
# Pure-JAX reference (same intended math) for a correctness check
# ----------------------------------------------------------------------------
def _ref_forward(real, imag, l_real, l_imag, w1, w2, conv_w, conv_b):
    def cheb(xr, xi, w):
        r = (jnp.einsum('knm,bmc->kbnc', l_real, xr)
             - jnp.einsum('knm,bmc->kbnc', l_imag, xi))
        i = (jnp.einsum('knm,bmc->kbnc', l_imag, xr)
             + jnp.einsum('knm,bmc->kbnc', l_real, xi))
        return (jnp.einsum('kbnc,kcf->bnf', r, w[:, 0]),
                jnp.einsum('kbnc,kcf->bnf', i, w[:, 0]))

    r1, i1 = cheb(real, imag, w1)
    r2, i2 = cheb(r1, i1, w2)
    x = jnp.concatenate([r2, i2], axis=-1)
    logits = jnp.einsum('bnc,dc->bdn', x, conv_w[:, :, 0]) + conv_b[None, :, None]
    return jax.nn.log_softmax(logits, axis=1)


# ----------------------------------------------------------------------------
if __name__ == "__main__":
    B, N, C_IN = 2, 16, 4          # batch, nodes, input channels
    K = 2                          # Chebyshev order
    NUM_FILTER = 2                 # module default
    LABEL_DIM = 2                  # module default
    KP1 = K + 1

    keys = jax.random.split(jax.random.PRNGKey(0), 8)
    real = jax.random.normal(keys[0], (B, N, C_IN), jnp.float32)
    imag = jax.random.normal(keys[1], (B, N, C_IN), jnp.float32)
    L_real = jax.random.normal(keys[2], (KP1, N, N), jnp.float32) / N
    L_imag = jax.random.normal(keys[3], (KP1, N, N), jnp.float32) / N

    # ChebConv weights: uniform(-1/sqrt(out_features), +1/sqrt(out_features))
    stdv = 1.0 / math.sqrt(NUM_FILTER)
    W1 = jax.random.uniform(keys[4], (KP1, 1, C_IN, NUM_FILTER), jnp.float32, -stdv, stdv)
    W2 = jax.random.uniform(keys[5], (KP1, 1, NUM_FILTER, NUM_FILTER), jnp.float32, -stdv, stdv)

    # Conv1d(num_filter*2 -> label_dim, kernel_size=1) parameters
    fan_in = NUM_FILTER * 2
    bound = 1.0 / math.sqrt(fan_in)
    conv_w = jax.random.uniform(keys[6], (LABEL_DIM, fan_in, 1), jnp.float32, -bound, bound)
    conv_b = jax.random.uniform(keys[7], (LABEL_DIM,), jnp.float32, -bound, bound)

    out = chebnet_forward(real, imag, L_real, L_imag, W1, W2, conv_w, conv_b)
    out = jax.block_until_ready(out)

    ref = jax.block_until_ready(
        _ref_forward(real, imag, L_real, L_imag, W1, W2, conv_w, conv_b))

    assert out.shape == (B, LABEL_DIM, N), out.shape
    assert jnp.allclose(out, ref, atol=1e-4, rtol=1e-4), (
        "mismatch vs reference: max abs err = %s" % float(jnp.max(jnp.abs(out - ref))))

    print("KERNEL_OK")
</pallas_src>

<mosaic_0001>
module attributes {stable_mosaic.version = 11 : i64} {
  func.func @_chebnet_fused_kernel(%arg0: i32, %arg1: memref<2x128xf32, #tpu.memory_space<vmem>>, %arg2: memref<128x64xf32, #tpu.memory_space<vmem>>, %arg3: memref<2x64x16xf32, #tpu.memory_space<vmem>>, %arg4: memref<2x2x16xf32, #tpu.memory_space<vmem>>, %arg5: memref<2x2x16xf32, #tpu.memory_space<vmem>>) attributes {dimension_semantics = [#tpu.dimension_semantics<arbitrary>], iteration_bounds = array<i64: 1>, scalar_prefetch = 0 : i64, scratch_operands = 0 : i64, tpu.core_type = #tpu.core_type<tc>, window_params = [{pipeline_mode = #tpu.pipeline_mode<synchronous>, transform_indices = @transform_0, window_bounds = array<i64: 2, 128>}, {pipeline_mode = #tpu.pipeline_mode<synchronous>, transform_indices = @transform_1, window_bounds = array<i64: 128, 64>}, {pipeline_mode = #tpu.pipeline_mode<synchronous>, transform_indices = @transform_2, window_bounds = array<i64: 2, 64, 16>}, {pipeline_mode = #tpu.pipeline_mode<synchronous>, transform_indices = @transform_3, window_bounds = array<i64: 2, 2, 16>}, {pipeline_mode = #tpu.pipeline_mode<synchronous>, transform_indices = @transform_4, window_bounds = array<i64: 2, 2, 16>}]} {
    %c0 = arith.constant 0 : index
    %c0_0 = arith.constant 0 : index
    %0 = vector.load %arg1[%c0, %c0_0] : memref<2x128xf32, #tpu.memory_space<vmem>>, vector<2x128xf32>
    %c0_1 = arith.constant 0 : index
    %c0_2 = arith.constant 0 : index
    %1 = vector.load %arg2[%c0_1, %c0_2] : memref<128x64xf32, #tpu.memory_space<vmem>>, vector<128x64xf32>
    %cst = arith.constant dense<0.000000e+00> : vector<2x64xf32>
    %2 = tpu.matmul %0, %1, %cst {dimension_numbers = #tpu.dot_dimension_numbers<[1], [0], [0], [1], [0, 0, 1, 1], [], []>} : vector<2x128xf32>, vector<128x64xf32>, vector<2x64xf32> -> vector<2x64xf32>
    %c0_3 = arith.constant 0 : index
    %c0_4 = arith.constant 0 : index
    %c0_5 = arith.constant 0 : index
    %3 = vector.load %arg3[%c0_3, %c0_4, %c0_5] : memref<2x64x16xf32, #tpu.memory_space<vmem>>, vector<1x64x16xf32>
    %4 = vector.shape_cast %3 : vector<1x64x16xf32> to vector<64x16xf32>
    %cst_6 = arith.constant dense<0.000000e+00> : vector<2x16xf32>
    %5 = tpu.matmul %2, %4, %cst_6 {dimension_numbers = #tpu.dot_dimension_numbers<[1], [0], [0], [1], [0, 0, 1, 1], [], []>} : vector<2x64xf32>, vector<64x16xf32>, vector<2x16xf32> -> vector<2x16xf32>
    %c0_7 = arith.constant 0 : index
    %c0_8 = arith.constant 0 : index
    %c0_9 = arith.constant 0 : index
    %6 = vector.load %arg4[%c0_7, %c0_8, %c0_9] : memref<2x2x16xf32, #tpu.memory_space<vmem>>, vector<1x2x16xf32>
    %7 = vector.shape_cast %6 : vector<1x2x16xf32> to vector<2x16xf32>
    %8 = arith.addf %5, %7 : vector<2x16xf32>
    %c1 = arith.constant 1 : index
    %c0_10 = arith.constant 0 : index
    %c0_11 = arith.constant 0 : index
    %9 = vector.load %arg3[%c1, %c0_10, %c0_11] : memref<2x64x16xf32, #tpu.memory_space<vmem>>, vector<1x64x16xf32>
    %10 = vector.shape_cast %9 : vector<1x64x16xf32> to vector<64x16xf32>
    %cst_12 = arith.constant dense<0.000000e+00> : vector<2x16xf32>
    %11 = tpu.matmul %2, %10, %cst_12 {dimension_numbers = #tpu.dot_dimension_numbers<[1], [0], [0], [1], [0, 0, 1, 1], [], []>} : vector<2x64xf32>, vector<64x16xf32>, vector<2x16xf32> -> vector<2x16xf32>
    %c1_13 = arith.constant 1 : index
    %c0_14 = arith.constant 0 : index
    %c0_15 = arith.constant 0 : index
    %12 = vector.load %arg4[%c1_13, %c0_14, %c0_15] : memref<2x2x16xf32, #tpu.memory_space<vmem>>, vector<1x2x16xf32>
    %13 = vector.shape_cast %12 : vector<1x2x16xf32> to vector<2x16xf32>
    %14 = arith.addf %11, %13 : vector<2x16xf32>
    %15 = arith.maximumf %8, %14 : vector<2x16xf32>
    %16 = arith.subf %8, %15 : vector<2x16xf32>
    %17 = math.exp %16 : vector<2x16xf32>
    %18 = arith.subf %14, %15 : vector<2x16xf32>
    %19 = math.exp %18 : vector<2x16xf32>
    %20 = arith.addf %17, %19 : vector<2x16xf32>
    %21 = math.log %20 : vector<2x16xf32>
    %22 = arith.addf %15, %21 : vector<2x16xf32>
    %23 = arith.subf %8, %22 : vector<2x16xf32>
    %c0_16 = arith.constant 0 : index
    %c0_17 = arith.constant 0 : index
    %c0_18 = arith.constant 0 : index
    %24 = vector.load %arg5[%c0_16, %c0_17, %c0_18] : memref<2x2x16xf32, #tpu.memory_space<vmem>>, vector<1x2x16xf32>
    %25 = vector.shape_cast %24 : vector<1x2x16xf32> to vector<2x16xf32>
    %26 = vector.shape_cast %23 : vector<2x16xf32> to vector<1x2x16xf32>
    tpu.vector_store %arg5[%c0_16, %c0_17, %c0_18], %26 {strides = array<i32>} : memref<2x2x16xf32, #tpu.memory_space<vmem>>, vector<1x2x16xf32>,
    %27 = arith.subf %14, %22 : vector<2x16xf32>
    %c1_19 = arith.constant 1 : index
    %c0_20 = arith.constant 0 : index
    %c0_21 = arith.constant 0 : index
    %28 = vector.load %arg5[%c1_19, %c0_20, %c0_21] : memref<2x2x16xf32, #tpu.memory_space<vmem>>, vector<1x2x16xf32>
    %29 = vector.shape_cast %28 : vector<1x2x16xf32> to vector<2x16xf32>
    %30 = vector.shape_cast %27 : vector<2x16xf32> to vector<1x2x16xf32>
    tpu.vector_store %arg5[%c1_19, %c0_20, %c0_21], %30 {strides = array<i32>} : memref<2x2x16xf32, #tpu.memory_space<vmem>>, vector<1x2x16xf32>,
    return
  }
  func.func @transform_0(%arg0: i32) -> (i32, i32) {
    %c0_i32 = arith.constant 0 : i32
    %c0_i32_0 = arith.constant 0 : i32
    %c0_i32_1 = arith.constant 0 : i32
    return %c0_i32, %c0_i32_0 : i32, i32
  }
  func.func @transform_1(%arg0: i32) -> (i32, i32) {
    %c0_i32 = arith.constant 0 : i32
    %c0_i32_0 = arith.constant 0 : i32
    %c0_i32_1 = arith.constant 0 : i32
    return %c0_i32, %c0_i32_0 : i32, i32
  }
  func.func @transform_2(%arg0: i32) -> (i32, i32, i32) {
    %c0_i32 = arith.constant 0 : i32
    %c0_i32_0 = arith.constant 0 : i32
    %c0_i32_1 = arith.constant 0 : i32
    %c0_i32_2 = arith.constant 0 : i32
    return %c0_i32, %c0_i32_0, %c0_i32_1 : i32, i32, i32
  }
  func.func @transform_3(%arg0: i32) -> (i32, i32, i32) {
    %c0_i32 = arith.constant 0 : i32
    %c0_i32_0 = arith.constant 0 : i32
    %c0_i32_1 = arith.constant 0 : i32
    %c0_i32_2 = arith.constant 0 : i32
    return %c0_i32, %c0_i32_0, %c0_i32_1 : i32, i32, i32
  }
  func.func @transform_4(%arg0: i32) -> (i32, i32, i32) {
    %c0_i32 = arith.constant 0 : i32
    %c0_i32_0 = arith.constant 0 : i32
    %c0_i32_1 = arith.constant 0 : i32
    %c0_i32_2 = arith.constant 0 : i32
    return %c0_i32, %c0_i32_0, %c0_i32_1 : i32, i32, i32
  }
}

</mosaic_0001>

<llo_original>
// kernel: neg.1
$region0: #{neg.1}
  #allocation2 [shape = 's32[1]{0}', space=sflag, size = 0x4, scoped, tag = 'scoped memory for neg.1']
  %s0 = inlined_call_operand.hbm [shape: f32[3,16,16], index: 0, kind: input, shape index: {}]
  %s1 = inlined_call_operand.vmem [shape: bf16[3,16,16], index: 1, kind: output, shape index: {}]
  $region1: #{neg.1} parent=0
    #allocation0 [shape = 'u8[24576]{0}', space=vmem, size = 0x6000, scoped, tag = 'operand span for operand 0']
    #allocation1 [shape = 's32[1]{0}', space=sflag, size = 0x4, scoped, tag = 'scoped memory for neg.1']
    %2 = vsyncpa [#allocation1], 0
    %s4 = ssub.s32 768, 768
    %5 = vsyncadd [#allocation1], %s4
    %s6 = sshll.u32 [#allocation0], 4
    %s7 = int_to_ptr.vmem [resolvable:$true] %s6
    %12 = dma.hbm_to_vmem [thread:$0]  %s0, 768, %s7, [#allocation1], 128, 128, 8
    %13 = dma.done [#allocation1], 768
    %v14 = vld [vmem:[#allocation0] sm:$0xff]
    %15 = xla_tuple %v14
    %16 = xla_tuple %15
    %v17 = vxor.u32 %v14, 2147483648
    %18 = xla_tuple %v17
    %v19 = vpack.c.bf16 0.0, %v17
    %20 = vst [vmem:[%s1] sm:$0xf] %v19
    %s21 = scalar_lea.vmem [#allocation0], 16
    %v22 = vld [vmem:[%s21] sm:$0xff]
    %23 = xla_tuple %v22
    %24 = xla_tuple %23
    %v25 = vxor.u32 %v22, 2147483648
    %26 = xla_tuple %v25
    %s27 = scalar_lea.vmem %s1, 8
    %v28 = vpack.c.bf16 0.0, %v25
    %29 = vst [vmem:[%s27] sm:$0xf] %v28
    %s30 = scalar_lea.vmem [#allocation0], 32
    %v31 = vld [vmem:[%s30] sm:$0xff]
    %32 = xla_tuple %v31
    %33 = xla_tuple %32
    %v34 = vxor.u32 %v31, 2147483648
    %35 = xla_tuple %v34
    %s36 = scalar_lea.vmem %s1, 16
    %v37 = vpack.c.bf16 0.0, %v34
    %38 = vst [vmem:[%s36] sm:$0xf] %v37
    %s39 = scalar_lea.vmem [#allocation0], 8
    %v40 = vld [vmem:[%s39] sm:$0xff]
    %41 = xla_tuple %v40
    %42 = xla_tuple %41
    %v43 = vxor.u32 %v40, 2147483648
    %44 = xla_tuple %v43
    %s45 = scalar_lea.vmem %s1, 4
    %v46 = vpack.c.bf16 0.0, %v43
    %47 = vst [vmem:[%s45] sm:$0xf] %v46
    %s48 = scalar_lea.vmem [#allocation0], 24
    %v49 = vld [vmem:[%s48] sm:$0xff]
    %50 = xla_tuple %v49
    %51 = xla_tuple %50
    %v52 = vxor.u32 %v49, 2147483648
    %53 = xla_tuple %v52
    %s54 = scalar_lea.vmem %s1, 12
    %v55 = vpack.c.bf16 0.0, %v52
    %56 = vst [vmem:[%s54] sm:$0xf] %v55
    %s57 = scalar_lea.vmem [#allocation0], 40
    %v58 = vld [vmem:[%s57] sm:$0xff]
    %59 = xla_tuple %v58
    %60 = xla_tuple %59
    %v61 = vxor.u32 %v58, 2147483648
    %62 = xla_tuple %v61
    %s63 = scalar_lea.vmem %s1, 20
    %v64 = vpack.c.bf16 0.0, %v61
    %65 = vst [vmem:[%s63] sm:$0xf] %v64
    %66 = vsyncpa [#allocation1], 1

// kernel: chebnet_forward.1
$region0: #{chebnet_forward.1}
  #allocation0 [shape = 'u32[]', space=smem, size = 0x4, offset = 0x4, fixed_abs, tag = 'smem constant byte address 0x4 - core index']
  #allocation1 [shape = 'u32[144,128]{1,0:T(1,128)}', space=vmem, size = 0x12000, scoped, tag = 'internal scratch']
  %s0 = inlined_call_operand.vmem [shape: f32[2,128], index: 0, kind: input, shape index: {}]
  %s1 = inlined_call_operand.vmem [shape: f32[128,64], index: 1, kind: input, shape index: {}]
  %s2 = inlined_call_operand.vmem [shape: f32[2,64,16], index: 2, kind: input, shape index: {}]
  %s3 = inlined_call_operand.vmem [shape: f32[2,2,16], index: 3, kind: input, shape index: {}]
  %s4 = inlined_call_operand.vmem [shape: f32[2,2,16], index: 4, kind: output, shape index: {}]
  %s5 = sld [smem:[#allocation0]]
  $region26: #{chebnet_forward.1} parent=0
    _
  %s7 = ssub.s32 1, %s5
  %s8 = scalar_select 0, %s7, %s5
  // Predicated region
  $region2: #{chebnet_forward.1} parent=0 // pred_check
    _
  $region3: #{chebnet_forward.1} parent=0 // pred_check_branch
    %10 = sbr.rel (0) target = $region5
  $region4: #{chebnet_forward.1} parent=0 // pred_region
    _
  $region5: #{chebnet_forward.1} parent=0 // pred_fallthru
    _
  // Predicated region
  $region6: #{chebnet_forward.1} parent=0 // pred_check
    _
  $region7: #{chebnet_forward.1} parent=0 // pred_check_branch
    %12 = sbr.rel (0) target = $region9
  $region8: #{chebnet_forward.1} parent=0 // pred_region
    _
  $region9: #{chebnet_forward.1} parent=0 // pred_fallthru
    _
  // Predicated region
  $region10: #{chebnet_forward.1} parent=0 // pred_check
    _
  $region11: #{chebnet_forward.1} parent=0 // pred_check_branch
    %14 = sbr.rel (0) target = $region13
  $region12: #{chebnet_forward.1} parent=0 // pred_region
    _
  $region13: #{chebnet_forward.1} parent=0 // pred_fallthru
    _
  // Predicated region
  $region14: #{chebnet_forward.1} parent=0 // pred_check
    _
  $region15: #{chebnet_forward.1} parent=0 // pred_check_branch
    %16 = sbr.rel (0) target = $region17
  $region16: #{chebnet_forward.1} parent=0 // pred_region
    _
  $region17: #{chebnet_forward.1} parent=0 // pred_fallthru
    _
  %v17 = vld [vmem:[%s0] sm:$0x3]
  %v18 = vld [vmem:[%s1] sm:$0xff]
  %v19 = vld [vmem:[%s1 + $0x8] sm:$0xff]
  %v20 = vld [vmem:[%s1 + $0x10] sm:$0xff]
  %v21 = vld [vmem:[%s1 + $0x18] sm:$0xff]
  %v22 = vld [vmem:[%s1 + $0x20] sm:$0xff]
  %v23 = vld [vmem:[%s1 + $0x28] sm:$0xff]
  %v24 = vld [vmem:[%s1 + $0x30] sm:$0xff]
  %v25 = vld [vmem:[%s1 + $0x38] sm:$0xff]
  %v26 = vld [vmem:[%s1 + $0x40] sm:$0xff]
  %v27 = vld [vmem:[%s1 + $0x48] sm:$0xff]
  %v28 = vld [vmem:[%s1 + $0x50] sm:$0xff]
  %v29 = vld [vmem:[%s1 + $0x58] sm:$0xff]
  %v30 = vld [vmem:[%s1 + $0x60] sm:$0xff]
  %v31 = vld [vmem:[%s1 + $0x68] sm:$0xff]
  %v32 = vld [vmem:[%s1 + $0x70] sm:$0xff]
  %v33 = vld [vmem:[%s1 + $0x78] sm:$0xff]
  %34 = vmatprep.subr.mxu0 0.0
  %35 = vmatpush1.msra.mxu0 %v33
  %36 = vmatprep.subr.mxu0 0.0
  %37 = vmatpush1.msra.mxu0 %v32
  %38 = vmatprep.subr.mxu0 0.0
  %39 = vmatpush1.msra.mxu0 %v31
  %40 = vmatprep.subr.mxu0 0.0
  %41 = vmatpush1.msra.mxu0 %v30
  %42 = vmatprep.subr.mxu0 0.0
  %43 = vmatpush1.msra.mxu0 %v29
  %44 = vmatprep.subr.mxu0 0.0
  %45 = vmatpush1.msra.mxu0 %v28
  %46 = vmatprep.subr.mxu0 0.0
  %47 = vmatpush1.msra.mxu0 %v27
  %48 = vmatprep.subr.mxu0 0.0
  %49 = vmatpush1.msra.mxu0 %v26
  %50 = vmatprep.subr.mxu0 0.0
  %51 = vmatpush1.msra.mxu0 %v25
  %52 = vmatprep.subr.mxu0 0.0
  %53 = vmatpush1.msra.mxu0 %v24
  %54 = vmatprep.subr.mxu0 0.0
  %55 = vmatpush1.msra.mxu0 %v23
  %56 = vmatprep.subr.mxu0 0.0
  %57 = vmatpush1.msra.mxu0 %v22
  %58 = vmatprep.subr.mxu0 0.0
  %59 = vmatpush1.msra.mxu0 %v21
  %60 = vmatprep.subr.mxu0 0.0
  %61 = vmatpush1.msra.mxu0 %v20
  %62 = vmatprep.subr.mxu0 0.0
  %63 = vmatpush1.msra.mxu0 %v19
  %64 = vmatprep.subr.mxu0 0.0
  %65 = vmatpush1.msra.mxu0 %v18
  %66 = vmatprep.subr.mxu0 0.0
  %67 = vmatpush2.msra.mxu0 0.0
  %68 = vmatprep.subr.mxu0 0.0
  %69 = vmatpush2.msra.mxu0 0.0
  %70 = vmatprep.subr.mxu0 0.0
  %71 = vmatpush2.msra.mxu0 0.0
  %72 = vmatprep.subr.mxu0 0.0
  %73 = vmatpush2.msra.mxu0 0.0
  %74 = vmatprep.subr.mxu0 0.0
  %75 = vmatpush2.msra.mxu0 0.0
  %76 = vmatprep.subr.mxu0 0.0
  %77 = vmatpush2.msra.mxu0 0.0
  %78 = vmatprep.subr.mxu0 0.0
  %79 = vmatpush2.msra.mxu0 0.0
  %80 = vmatprep.subr.mxu0 0.0
  %81 = vmatpush2.msra.mxu0 0.0
  %82 = vmatprep.subr.mxu0 0.0
  %83 = vmatpush2.msra.mxu0 0.0
  %84 = vmatprep.subr.mxu0 0.0
  %85 = vmatpush2.msra.mxu0 0.0
  %86 = vmatprep.subr.mxu0 0.0
  %87 = vmatpush2.msra.mxu0 0.0
  %88 = vmatprep.subr.mxu0 0.0
  %89 = vmatpush2.msra.mxu0 0.0
  %90 = vmatprep.subr.mxu0 0.0
  %91 = vmatpush2.msra.mxu0 0.0
  %92 = vmatprep.subr.mxu0 0.0
  %93 = vmatpush2.msra.mxu0 0.0
  %94 = vmatprep.subr.mxu0 0.0
  %95 = vmatpush2.msra.mxu0 0.0
  %96 = vmatprep.subr.mxu0 0.0
  %97 = vmatpush2.msra.mxu0 0.0
  %98 = vmatprep.mubr.f32.mxu0 0.0
  %99 = vmatmul.mubr.f32.gmra.mxu0 %v17
  %v100 = vpop.f32.mrf.mxu0
  %v101 = vadd.f32 0.0, %v100
  %v102 = vpop.f32.mrf.mxu0
  %103 = vdwg.mxu0
  %v104 = vld [vmem:[%s2] sm:$0xff]
  %v105 = vld [vmem:[%s2 + $0x8] sm:$0xff]
  %v106 = vld [vmem:[%s2 + $0x10] sm:$0xff]
  %v107 = vld [vmem:[%s2 + $0x18] sm:$0xff]
  %v108 = vld [vmem:[%s2 + $0x20] sm:$0xff]
  %v109 = vld [vmem:[%s2 + $0x28] sm:$0xff]
  %v110 = vld [vmem:[%s2 + $0x30] sm:$0xff]
  %v111 = vld [vmem:[%s2 + $0x38] sm:$0xff]
  %v112 = vld [vmem:[%s3] sm:$0x3]
  %vm113 = vcmask 523264
  %v115 = vsel %vm113, %v101, 0
  %117 = vmatprep.subr.mxu0 0.0
  %118 = vmatpush1.msra.mxu0 0.0
  %119 = vmatprep.subr.mxu0 0.0
  %120 = vmatpush1.msra.mxu0 0.0
  %121 = vmatprep.subr.mxu0 0.0
  %122 = vmatpush1.msra.mxu0 0.0
  %123 = vmatprep.subr.mxu0 0.0
  %124 = vmatpush1.msra.mxu0 0.0
  %125 = vmatprep.subr.mxu0 0.0
  %126 = vmatpush1.msra.mxu0 0.0
  %127 = vmatprep.subr.mxu0 0.0
  %128 = vmatpush1.msra.mxu0 0.0
  %129 = vmatprep.subr.mxu0 0.0
  %130 = vmatpush1.msra.mxu0 0.0
  %131 = vmatprep.subr.mxu0 0.0
  %132 = vmatpush1.msra.mxu0 0.0
  %133 = vmatprep.subr.mxu0 0.0
  %134 = vmatpush1.msra.mxu0 %v111
  %135 = vmatprep.subr.mxu0 0.0
  %136 = vmatpush1.msra.mxu0 %v110
  %137 = vmatprep.subr.mxu0 0.0
  %138 = vmatpush1.msra.mxu0 %v109
  %139 = vmatprep.subr.mxu0 0.0
  %140 = vmatpush1.msra.mxu0 %v108
  %141 = vmatprep.subr.mxu0 0.0
  %142 = vmatpush1.msra.mxu0 %v107
  %143 = vmatprep.subr.mxu0 0.0
  %144 = vmatpush1.msra.mxu0 %v106
  %145 = vmatprep.subr.mxu0 0.0
  %146 = vmatpush1.msra.mxu0 %v105
  %147 = vmatprep.subr.mxu0 0.0
  %148 = vmatpush1.msra.mxu0 %v104
  %149 = vmatprep.subr.mxu0 0.0
  %150 = vmatpush2.msra.mxu0 0.0
  %151 = vmatprep.subr.mxu0 0.0
  %152 = vmatpush2.msra.mxu0 0.0
  %153 = vmatprep.subr.mxu0 0.0
  %154 = vmatpush2.msra.mxu0 0.0
  %155 = vmatprep.subr.mxu0 0.0
  %156 = vmatpush2.msra.mxu0 0.0
  %157 = vmatprep.subr.mxu0 0.0
  %158 = vmatpush2.msra.mxu0 0.0
  %159 = vmatprep.subr.mxu0 0.0
  %160 = vmatpush2.msra.mxu0 0.0
  %161 = vmatprep.subr.mxu0 0.0
  %162 = vmatpush2.msra.mxu0 0.0
  %163 = vmatprep.subr.mxu0 0.0
  %164 = vmatpush2.msra.mxu0 0.0
  %165 = vmatprep.subr.mxu0 0.0
  %166 = vmatpush2.msra.mxu0 0.0
  %167 = vmatprep.subr.mxu0 0.0
  %168 = vmatpush2.msra.mxu0 0.0
  %169 = vmatprep.subr.mxu0 0.0
  %170 = vmatpush2.msra.mxu0 0.0
  %171 = vmatprep.subr.mxu0 0.0
  %172 = vmatpush2.msra.mxu0 0.0
  %173 = vmatprep.subr.mxu0 0.0
  %174 = vmatpush2.msra.mxu0 0.0
  %175 = vmatprep.subr.mxu0 0.0
  %176 = vmatpush2.msra.mxu0 0.0
  %177 = vmatprep.subr.mxu0 0.0
  %178 = vmatpush2.msra.mxu0 0.0
  %179 = vmatprep.subr.mxu0 0.0
  %180 = vmatpush2.msra.mxu0 0.0
  %181 = vmatprep.mubr.f32.mxu0 0.0
  %182 = vmatmul.mubr.f32.gmra.mxu0 %v115
  %v183 = vpop.f32.mrf.mxu0
  %v184 = vadd.f32 %v112, %v183
  %v185 = vpop.f32.mrf.mxu0
  %186 = vdwg.mxu0
  %s187 = scalar_lea.vmem %s2, 64
  %v188 = vld [vmem:[%s187] sm:$0xff]
  %v189 = vld [vmem:[%s187 + $0x8] sm:$0xff]
  %v190 = vld [vmem:[%s187 + $0x10] sm:$0xff]
  %v191 = vld [vmem:[%s187 + $0x18] sm:$0xff]
  %v192 = vld [vmem:[%s187 + $0x20] sm:$0xff]
  %v193 = vld [vmem:[%s187 + $0x28] sm:$0xff]
  %v194 = vld [vmem:[%s187 + $0x30] sm:$0xff]
  %v195 = vld [vmem:[%s187 + $0x38] sm:$0xff]
  %s196 = scalar_lea.vmem %s3, 2
  %v197 = vld [vmem:[%s196] sm:$0x3]
  %198 = vmatprep.subr.mxu0 0.0
  %199 = vmatpush1.msra.mxu0 0.0
  %200 = vmatprep.subr.mxu0 0.0
  %201 = vmatpush1.msra.mxu0 0.0
  %202 = vmatprep.subr.mxu0 0.0
  %203 = vmatpush1.msra.mxu0 0.0
  %204 = vmatprep.subr.mxu0 0.0
  %205 = vmatpush1.msra.mxu0 0.0
  %206 = vmatprep.subr.mxu0 0.0
  %207 = vmatpush1.msra.mxu0 0.0
  %208 = vmatprep.subr.mxu0 0.0
  %209 = vmatpush1.msra.mxu0 0.0
  %210 = vmatprep.subr.mxu0 0.0
  %211 = vmatpush1.msra.mxu0 0.0
  %212 = vmatprep.subr.mxu0 0.0
  %213 = vmatpush1.msra.mxu0 0.0
  %214 = vmatprep.subr.mxu0 0.0
  %215 = vmatpush1.msra.mxu0 %v195
  %216 = vmatprep.subr.mxu0 0.0
  %217 = vmatpush1.msra.mxu0 %v194
  %218 = vmatprep.subr.mxu0 0.0
  %219 = vmatpush1.msra.mxu0 %v193
  %220 = vmatprep.subr.mxu0 0.0
  %221 = vmatpush1.msra.mxu0 %v192
  %222 = vmatprep.subr.mxu0 0.0
  %223 = vmatpush1.msra.mxu0 %v191
  %224 = vmatprep.subr.mxu0 0.0
  %225 = vmatpush1.msra.mxu0 %v190
  %226 = vmatprep.subr.mxu0 0.0
  %227 = vmatpush1.msra.mxu0 %v189
  %228 = vmatprep.subr.mxu0 0.0
  %229 = vmatpush1.msra.mxu0 %v188
  %230 = vmatprep.subr.mxu0 0.0
  %231 = vmatpush2.msra.mxu0 0.0
  %232 = vmatprep.subr.mxu0 0.0
  %233 = vmatpush2.msra.mxu0 0.0
  %234 = vmatprep.subr.mxu0 0.0
  %235 = vmatpush2.msra.mxu0 0.0
  %236 = vmatprep.subr.mxu0 0.0
  %237 = vmatpush2.msra.mxu0 0.0
  %238 = vmatprep.subr.mxu0 0.0
  %239 = vmatpush2.msra.mxu0 0.0
  %240 = vmatprep.subr.mxu0 0.0
  %241 = vmatpush2.msra.mxu0 0.0
  %242 = vmatprep.subr.mxu0 0.0
  %243 = vmatpush2.msra.mxu0 0.0
  %244 = vmatprep.subr.mxu0 0.0
  %245 = vmatpush2.msra.mxu0 0.0
  %246 = vmatprep.subr.mxu0 0.0
  %247 = vmatpush2.msra.mxu0 0.0
  %248 = vmatprep.subr.mxu0 0.0
  %249 = vmatpush2.msra.mxu0 0.0
  %250 = vmatprep.subr.mxu0 0.0
  %251 = vmatpush2.msra.mxu0 0.0
  %252 = vmatprep.subr.mxu0 0.0
  %253 = vmatpush2.msra.mxu0 0.0
  %254 = vmatprep.subr.mxu0 0.0
  %255 = vmatpush2.msra.mxu0 0.0
  %256 = vmatprep.subr.mxu0 0.0
  %257 = vmatpush2.msra.mxu0 0.0
  %258 = vmatprep.subr.mxu0 0.0
  %259 = vmatpush2.msra.mxu0 0.0
  %260 = vmatprep.subr.mxu0 0.0
  %261 = vmatpush2.msra.mxu0 0.0
  %262 = vmatprep.mubr.f32.mxu0 0.0
  %263 = vmatmul.mubr.f32.gmra.mxu0 %v115
  %v264 = vpop.f32.mrf.mxu0
  %v265 = vadd.f32 %v197, %v264
  %v266 = vpop.f32.mrf.mxu0
  %267 = vdwg.mxu0
  %v268 = vmax.f32 %v184, %v265
  %v269 = vsub.f32 %v184, %v268
  %v270 = vmul.f32 %v269, 1.442695
  %v271 = vpow.pop %v270
  %v272 = vsub.f32 %v265, %v268
  %v273 = vmul.f32 %v272, 1.442695
  %v274 = vpow.pop %v273
  %v275 = vadd.f32 %v271, %v274
  %v276 = vlog2.pop %v275
  %v277 = vmul.f32 %v276, 0.6931472
  %v278 = vadd.f32 %v268, %v277
  %v279 = vsub.f32 %v184, %v278
  %vm280 = vcmask 123904
  %281 = vst.msk [vmem:[%s4] sm:$0x3] %vm280, %v279
  %v282 = vsub.f32 %v265, %v278
  %s283 = scalar_lea.vmem %s4, 2
  %284 = vst.msk [vmem:[%s283] sm:$0x3] %vm280, %v282
  // Predicated region
  $region18: #{chebnet_forward.1} parent=0 // pred_check
    _
  $region19: #{chebnet_forward.1} parent=0 // pred_check_branch
    %286 = sbr.rel (0) target = $region21
  $region20: #{chebnet_forward.1} parent=0 // pred_region
    _
  $region21: #{chebnet_forward.1} parent=0 // pred_fallthru
    _
  // Predicated region
  $region22: #{chebnet_forward.1} parent=0 // pred_check
    _
  $region23: #{chebnet_forward.1} parent=0 // pred_check_branch
    %288 = sbr.rel (0) target = $region25
  $region24: #{chebnet_forward.1} parent=0 // pred_region
    _
  $region25: #{chebnet_forward.1} parent=0 // pred_fallthru
    _

</llo_original>
